<compile_context>
chip_gen: v6e
topology: v6e:2x2x1
jax: 0.10.0
libtpu: 0.0.40
codegen_flags: <defaults>
</compile_context>

<pallas_src>
import functools

import jax
import jax.numpy as jnp
import numpy as np
from jax.experimental import pallas as pl
from jax.experimental.pallas import tpu as pltpu


def _round_up(x: int, m: int) -> int:
    return ((x + m - 1) // m) * m


def _vmem_bytes(tile_m: int, tile_k: int, hw_pad: int, cdt) -> int:
    # Double-buffered live-block bytes for one grid step.
    return 2 * (tile_k * hw_pad * cdt.itemsize      # x tile
                + tile_m * tile_k * cdt.itemsize    # w2 tile
                + tile_m * hw_pad * 4               # out tile (f32)
                + tile_k * 4                        # SE gate vector
                + 2 * tile_m * 4)                   # gamma, beta


def _gate_matmul_bn_kernel(s_ref, x_ref, w2_ref, gamma_ref, beta_ref, o_ref,
                           *, eps: float, hw_true: int):
    # s_ref      : [TILE_K, 1]       precomputed sigmoid(conv2d127) gate (f32)
    # x_ref      : [TILE_K, HW_pad]  feature-map K tile (bf16; resident if num_k==1)
    # w2_ref     : [TILE_M, TILE_K]  conv2d128 weight tile (bf16)
    # gamma/beta : [TILE_M, 1]       BatchNorm affine params (f32)
    # o_ref      : [TILE_M, HW_pad]  f32 output tile; doubles as the K accumulator
    k = pl.program_id(1)

    # Gate on the VPU in f32, cast to bf16 only at the MXU input; matmul on MXU.
    y = (s_ref[...] * x_ref[...]).astype(w2_ref.dtype)
    z = jnp.dot(w2_ref[...], y, preferred_element_type=jnp.float32)

    @pl.when(k == 0)
    def _init():
        o_ref[...] = z

    @pl.when(k != 0)
    def _accum():
        o_ref[...] += z

    # Finalize: training-mode BatchNorm (N == 1 -> statistics over HW only),
    # two-pass mean/variance with the zero-padded HW columns masked out.
    @pl.when(k == pl.num_programs(1) - 1)
    def _finalize():
        zf = o_ref[...]
        inv_hw = 1.0 / float(hw_true)
        mean = jnp.sum(zf, axis=1, keepdims=True) * inv_hw
        col = jax.lax.broadcasted_iota(jnp.int32, zf.shape, 1)
        d = jnp.where(col < hw_true, zf - mean, 0.0)
        var = jnp.sum(d * d, axis=1, keepdims=True) * inv_hw       # biased var
        z_hat = (zf - mean) * jax.lax.rsqrt(var + eps)
        o_ref[...] = (gamma_ref[...] * z_hat + beta_ref[...]).astype(o_ref.dtype)
    # TODO(synk): BatchNorm running_mean/running_var updates are a training-time
    # side effect not returned by forward(); intentionally not materialized.
    # TODO(synk): downstream-permitting, emit bf16 output and/or quantize w2
    # (int8 on v5e/v6e, fp8-e4m3 on v7x) to halve the dominant weight stream;
    # optionally sweep pipeline_mode=pl.Buffered(3) on the w2 BlockSpec.


def make_plan(c_in, c, h, w, *, tile_m=None, tile_k=None,
              compute_dtype=jnp.bfloat16, eps=1e-5):
    hw = h * w
    hw_pad = _round_up(hw, 128)
    cdt = jnp.dtype(compute_dtype)

    if tile_m is None:
        if c > 1024:
            # Real shape (C=2904): c_pad_m = 3072 -> 6 i-steps (even -> balanced
            # across v7x's two TensorCores).
            tile_m = 512
        else:
            tile_m = _round_up(min(c, 256), 8)
    assert tile_m % 8 == 0 and tile_m >= 8

    if tile_k is None:
        # Fast path: collapse K entirely and keep the gated feature map resident
        # in VMEM (x fetched once for the whole grid, no accumulation steps).
        full_k = _round_up(c, 128)
        if _vmem_bytes(tile_m, full_k, hw_pad, cdt) <= (40 << 20):
            tile_k = full_k
        else:
            # Large feature maps: keep the K grid axis and stream x per K tile.
            tile_k = 512
    assert tile_k % 128 == 0

    c_pad_m = _round_up(c, tile_m)
    c_pad_k = _round_up(c, tile_k)
    num_i = c_pad_m // tile_m
    num_k = c_pad_k // tile_k
    vmem_limit = int(min(max(_vmem_bytes(tile_m, tile_k, hw_pad, cdt) + (2 << 20),
                             4 << 20), 64 << 20))
    return dict(c_in=c_in, c=c, h=h, w=w, hw=hw, hw_pad=hw_pad,
                tile_m=tile_m, tile_k=tile_k, c_pad_m=c_pad_m, c_pad_k=c_pad_k,
                num_i=num_i, num_k=num_k, vmem_limit=vmem_limit,
                compute_dtype=cdt, eps=float(eps))


def prepare_params(plan, w1, b1, w2, gamma, beta):
    """Pre-pad / pre-cast static parameters once, outside the per-call path."""
    c, cdt, f32 = plan["c"], plan["compute_dtype"], jnp.float32
    w2p = jnp.pad(w2.astype(cdt),
                  ((0, plan["c_pad_m"] - c), (0, plan["c_pad_k"] - c)))
    gammap = jnp.pad(gamma.reshape(c, 1).astype(f32),
                     ((0, plan["c_pad_m"] - c), (0, 0)))
    betap = jnp.pad(beta.reshape(c, 1).astype(f32),
                    ((0, plan["c_pad_m"] - c), (0, 0)))
    return dict(w1=w1.astype(f32), b1=b1.astype(f32), w2=w2p,
                gamma=gammap, beta=betap)


def forward(plan, params, x402, x399):
    """Pallas implementation of M.forward (training-mode BatchNorm)."""
    n_se, c_in, hse, wse = x402.shape
    n, c, h, w = x399.shape
    assert n == 1 and n_se == 1 and hse == 1 and wse == 1
    assert (c_in, c, h, w) == (plan["c_in"], plan["c"], plan["h"], plan["w"])
    f32 = jnp.float32
    cdt = plan["compute_dtype"]
    hw, hw_pad = plan["hw"], plan["hw_pad"]
    tile_m, tile_k = plan["tile_m"], plan["tile_k"]
    num_i, num_k = plan["num_i"], plan["num_k"]

    # conv2d127 + sigmoid24 hoisted out of the kernel: a tiny (C x Cin) f32
    # matvec.  Padded gate entries are 0 and multiply padded (zero) channels.
    s = jax.nn.sigmoid(params["w1"] @ x402.reshape(c_in).astype(f32)
                       + params["b1"])
    s = jnp.pad(s.reshape(c, 1), ((0, plan["c_pad_k"] - c), (0, 0)))

    # Activations: channel-major, lane-dense zero padding (padded HW columns are
    # masked out of the BN statistics inside the kernel).
    x2 = jnp.pad(x399.reshape(c, hw).astype(cdt),
                 ((0, plan["c_pad_k"] - c), (0, hw_pad - hw)))

    x_reads = 1 if num_k == 1 else num_i
    cost = pl.CostEstimate(
        flops=(2 * plan["c_pad_m"] * plan["c_pad_k"] * hw_pad
               + 3 * num_i * plan["c_pad_k"] * hw_pad),
        transcendentals=0,
        bytes_accessed=(x_reads * plan["c_pad_k"] * hw_pad * cdt.itemsize   # x
                        + plan["c_pad_m"] * plan["c_pad_k"] * cdt.itemsize  # w2
                        + x_reads * plan["c_pad_k"] * 4                     # gate
                        + plan["c_pad_m"] * hw_pad * 4))                    # out

    grid_spec = pltpu.PrefetchScalarGridSpec(
        num_scalar_prefetch=0,
        grid=(num_i, num_k),
        in_specs=[
            pl.BlockSpec((tile_k, 1), lambda i, k: (k, 0)),        # SE gate
            pl.BlockSpec((tile_k, hw_pad), lambda i, k: (k, 0)),   # x
            pl.BlockSpec((tile_m, tile_k), lambda i, k: (i, k)),   # w2
            pl.BlockSpec((tile_m, 1), lambda i, k: (i, 0)),        # gamma
            pl.BlockSpec((tile_m, 1), lambda i, k: (i, 0)),        # beta
        ],
        out_specs=pl.BlockSpec((tile_m, hw_pad), lambda i, k: (i, 0)),
    )

    out = pl.pallas_call(
        functools.partial(_gate_matmul_bn_kernel, eps=plan["eps"], hw_true=hw),
        out_shape=jax.ShapeDtypeStruct((plan["c_pad_m"], hw_pad), jnp.float32),
        grid_spec=grid_spec,
        compiler_params=pltpu.CompilerParams(
            dimension_semantics=("parallel", "arbitrary"),
            vmem_limit_bytes=plan["vmem_limit"]),
        cost_estimate=cost,
    )(s, x2, params["w2"], params["gamma"], params["beta"])

    return out[:c, :hw].reshape(1, c, h, w)


def reference(x402, x399, w1, b1, w2, gamma, beta, eps=1e-5):
    """Pure-JAX f32 reference matching PyTorch semantics (training-mode BN)."""
    n, c_in, _, _ = x402.shape
    s = jnp.einsum("oi,ni->no", w1, x402.reshape(n, c_in)) + b1[None, :]
    s = jax.nn.sigmoid(s)[:, :, None, None]
    y = s * x399
    z = jnp.einsum("oc,nchw->nohw", w2, y)
    mean = jnp.mean(z, axis=(0, 2, 3), keepdims=True)
    var = jnp.mean((z - mean) ** 2, axis=(0, 2, 3), keepdims=True)
    z_hat = (z - mean) / jnp.sqrt(var + eps)
    return gamma[None, :, None, None] * z_hat + beta[None, :, None, None]


if __name__ == "__main__":
    key = jax.random.PRNGKey(0)
    keys = jax.random.split(key, 7)

    # Small shapes consistent with the module (real: Cin=726, C=2904, H=W=14).
    N, Cin, C, H, W = 1, 72, 144, 14, 14

    x402 = jax.random.normal(keys[0], (N, Cin, 1, 1), jnp.float32)
    x399 = jax.random.normal(keys[1], (N, C, H, W), jnp.float32)
    w1 = jax.random.normal(keys[2], (C, Cin), jnp.float32) * 0.1      # conv2d127
    b1 = jax.random.normal(keys[3], (C,), jnp.float32) * 0.1
    w2 = jax.random.normal(keys[4], (C, C), jnp.float32) * 0.1        # conv2d128
    gamma = 1.0 + jax.random.normal(keys[5], (C,), jnp.float32) * 0.1
    beta = jax.random.normal(keys[6], (C,), jnp.float32) * 0.1

    ref = reference(x402, x399, w1, b1, w2, gamma, beta)

    # Path 1: fast path -- K collapsed (num_k == 1, x resident), 3 i-tiles.
    plan1 = make_plan(Cin, C, H, W, tile_m=48)
    params1 = prepare_params(plan1, w1, b1, w2, gamma, beta)
    out1 = forward(plan1, params1, x402, x399)
    jax.block_until_ready(out1)
    np.testing.assert_allclose(np.asarray(out1), np.asarray(ref),
                               rtol=5e-2, atol=5e-2)

    # Path 2: K-tiled fallback (num_k == 2) exercising the o_ref accumulation.
    plan2 = make_plan(Cin, C, H, W, tile_m=48, tile_k=128)
    params2 = prepare_params(plan2, w1, b1, w2, gamma, beta)
    out2 = forward(plan2, params2, x402, x399)
    jax.block_until_ready(out2)
    np.testing.assert_allclose(np.asarray(out2), np.asarray(ref),
                               rtol=5e-2, atol=5e-2)

    print("KERNEL_OK")
</pallas_src>

<mosaic_0001>
module attributes {stable_mosaic.version = 11 : i64} {
  func.func @_gate_matmul_bn_kernel(%arg0: i32, %arg1: i32, %arg2: memref<256x1xf32, #tpu.memory_space<vmem>>, %arg3: memref<256x256xbf16, #tpu.memory_space<vmem>>, %arg4: memref<48x256xbf16, #tpu.memory_space<vmem>>, %arg5: memref<48x1xf32, #tpu.memory_space<vmem>>, %arg6: memref<48x1xf32, #tpu.memory_space<vmem>>, %arg7: memref<48x256xf32, #tpu.memory_space<vmem>>) attributes {dimension_semantics = [#tpu.dimension_semantics<parallel>, #tpu.dimension_semantics<arbitrary>], iteration_bounds = array<i64: 3, 1>, scalar_prefetch = 0 : i64, scratch_operands = 0 : i64, tpu.core_type = #tpu.core_type<tc>, window_params = [{transform_indices = @transform_0, window_bounds = array<i64: 256, 1>}, {transform_indices = @transform_1, window_bounds = array<i64: 256, 256>}, {transform_indices = @transform_2, window_bounds = array<i64: 48, 256>}, {transform_indices = @transform_3, window_bounds = array<i64: 48, 1>}, {transform_indices = @transform_4, window_bounds = array<i64: 48, 1>}, {transform_indices = @transform_5, window_bounds = array<i64: 48, 256>}]} {
    %c0 = arith.constant 0 : index
    %c0_0 = arith.constant 0 : index
    %0 = vector.load %arg2[%c0, %c0_0] : memref<256x1xf32, #tpu.memory_space<vmem>>, vector<256x1xf32>
    %c0_1 = arith.constant 0 : index
    %c0_2 = arith.constant 0 : index
    %1 = vector.load %arg3[%c0_1, %c0_2] : memref<256x256xbf16, #tpu.memory_space<vmem>>, vector<256x256xbf16>
    %2 = arith.extf %1 : vector<256x256xbf16> to vector<256x256xf32>
    %3 = vector.broadcast %0 : vector<256x1xf32> to vector<256x256xf32>
    %4 = arith.mulf %3, %2 : vector<256x256xf32>
    %5 = arith.truncf %4 : vector<256x256xf32> to vector<256x256xbf16>
    %c0_3 = arith.constant 0 : index
    %c0_4 = arith.constant 0 : index
    %6 = vector.load %arg4[%c0_3, %c0_4] : memref<48x256xbf16, #tpu.memory_space<vmem>>, vector<48x256xbf16>
    %cst = arith.constant dense<0.000000e+00> : vector<48x256xf32>
    %7 = tpu.matmul %6, %5, %cst {dimension_numbers = #tpu.dot_dimension_numbers<[1], [0], [0], [1], [0, 0, 1, 1], [], []>} : vector<48x256xbf16>, vector<256x256xbf16>, vector<48x256xf32> -> vector<48x256xf32>
    %c0_i32 = arith.constant 0 : i32
    %8 = arith.cmpi eq, %arg1, %c0_i32 : i32
    %9 = arith.extui %8 : i1 to i32
    %c0_i32_5 = arith.constant 0 : i32
    %10 = arith.cmpi ne, %9, %c0_i32_5 : i32
    scf.if %10 {
      %c0_10 = arith.constant 0 : index
      %c0_11 = arith.constant 0 : index
      %17 = vector.load %arg7[%c0_10, %c0_11] : memref<48x256xf32, #tpu.memory_space<vmem>>, vector<48x256xf32>
      tpu.vector_store %arg7[%c0_10, %c0_11], %7 {strides = array<i32>} : memref<48x256xf32, #tpu.memory_space<vmem>>, vector<48x256xf32>,
    } else {
    }
    %c0_i32_6 = arith.constant 0 : i32
    %11 = arith.cmpi ne, %arg1, %c0_i32_6 : i32
    %12 = arith.extui %11 : i1 to i32
    %c0_i32_7 = arith.constant 0 : i32
    %13 = arith.cmpi ne, %12, %c0_i32_7 : i32
    scf.if %13 {
      %c0_10 = arith.constant 0 : index
      %c0_11 = arith.constant 0 : index
      %17 = vector.load %arg7[%c0_10, %c0_11] : memref<48x256xf32, #tpu.memory_space<vmem>>, vector<48x256xf32>
      %18 = arith.addf %17, %7 : vector<48x256xf32>
      %c0_12 = arith.constant 0 : index
      %c0_13 = arith.constant 0 : index
      %19 = vector.load %arg7[%c0_12, %c0_13] : memref<48x256xf32, #tpu.memory_space<vmem>>, vector<48x256xf32>
      tpu.vector_store %arg7[%c0_12, %c0_13], %18 {strides = array<i32>} : memref<48x256xf32, #tpu.memory_space<vmem>>, vector<48x256xf32>,
    } else {
    }
    %c0_i32_8 = arith.constant 0 : i32
    %14 = arith.cmpi eq, %arg1, %c0_i32_8 : i32
    %15 = arith.extui %14 : i1 to i32
    %c0_i32_9 = arith.constant 0 : i32
    %16 = arith.cmpi ne, %15, %c0_i32_9 : i32
    scf.if %16 {
      %c0_10 = arith.constant 0 : index
      %c0_11 = arith.constant 0 : index
      %17 = vector.load %arg7[%c0_10, %c0_11] : memref<48x256xf32, #tpu.memory_space<vmem>>, vector<48x256xf32>
      %cst_12 = arith.constant dense<0.000000e+00> : vector<48xf32>
      %18 = vector.multi_reduction <add>, %17, %cst_12 [1] : vector<48x256xf32> to vector<48xf32>
      %19 = vector.shape_cast %18 : vector<48xf32> to vector<48x1xf32>
      %cst_13 = arith.constant 0.00510204071 : f32
      %20 = vector.broadcast %cst_13 : f32 to vector<48x1xf32>
      %21 = arith.mulf %19, %20 : vector<48x1xf32>
      %22 = tpu.iota {dimensions = array<i32: 1>} : vector<48x256xi32>
      %c196_i32 = arith.constant 196 : i32
      %23 = vector.broadcast %c196_i32 : i32 to vector<48x256xi32>
      %24 = arith.cmpi slt, %22, %23 : vector<48x256xi32>
      %25 = vector.broadcast %21 : vector<48x1xf32> to vector<48x256xf32>
      %26 = arith.subf %17, %25 : vector<48x256xf32>
      %cst_14 = arith.constant 0.000000e+00 : f32
      %27 = vector.broadcast %cst_14 : f32 to vector<48x256xf32>
      %28 = arith.select %24, %26, %27 : vector<48x256xi1>, vector<48x256xf32>
      %29 = arith.mulf %28, %28 : vector<48x256xf32>
      %cst_15 = arith.constant dense<0.000000e+00> : vector<48xf32>
      %30 = vector.multi_reduction <add>, %29, %cst_15 [1] : vector<48x256xf32> to vector<48xf32>
      %31 = vector.shape_cast %30 : vector<48xf32> to vector<48x1xf32>
      %cst_16 = arith.constant 0.00510204071 : f32
      %32 = vector.broadcast %cst_16 : f32 to vector<48x1xf32>
      %33 = arith.mulf %31, %32 : vector<48x1xf32>
      %34 = vector.broadcast %21 : vector<48x1xf32> to vector<48x256xf32>
      %35 = arith.subf %17, %34 : vector<48x256xf32>
      %cst_17 = arith.constant 9.99999974E-6 : f32
      %36 = vector.broadcast %cst_17 : f32 to vector<48x1xf32>
      %37 = arith.addf %33, %36 : vector<48x1xf32>
      %38 = math.rsqrt %37 : vector<48x1xf32>
      %39 = vector.broadcast %38 : vector<48x1xf32> to vector<48x256xf32>
      %40 = arith.mulf %35, %39 : vector<48x256xf32>
      %c0_18 = arith.constant 0 : index
      %c0_19 = arith.constant 0 : index
      %41 = vector.load %arg5[%c0_18, %c0_19] : memref<48x1xf32, #tpu.memory_space<vmem>>, vector<48x1xf32>
      %42 = vector.broadcast %41 : vector<48x1xf32> to vector<48x256xf32>
      %43 = arith.mulf %42, %40 : vector<48x256xf32>
      %c0_20 = arith.constant 0 : index
      %c0_21 = arith.constant 0 : index
      %44 = vector.load %arg6[%c0_20, %c0_21] : memref<48x1xf32, #tpu.memory_space<vmem>>, vector<48x1xf32>
      %45 = vector.broadcast %44 : vector<48x1xf32> to vector<48x256xf32>
      %46 = arith.addf %43, %45 : vector<48x256xf32>
      %c0_22 = arith.constant 0 : index
      %c0_23 = arith.constant 0 : index
      %47 = vector.load %arg7[%c0_22, %c0_23] : memref<48x256xf32, #tpu.memory_space<vmem>>, vector<48x256xf32>
      tpu.vector_store %arg7[%c0_22, %c0_23], %46 {strides = array<i32>} : memref<48x256xf32, #tpu.memory_space<vmem>>, vector<48x256xf32>,
    } else {
    }
    return
  }
  func.func @transform_0(%arg0: i32, %arg1: i32) -> (i32, i32) {
    %c0_i32 = arith.constant 0 : i32
    %c0_i32_0 = arith.constant 0 : i32
    return %arg1, %c0_i32 : i32, i32
  }
  func.func @transform_1(%arg0: i32, %arg1: i32) -> (i32, i32) {
    %c0_i32 = arith.constant 0 : i32
    %c0_i32_0 = arith.constant 0 : i32
    return %arg1, %c0_i32 : i32, i32
  }
  func.func @transform_2(%arg0: i32, %arg1: i32) -> (i32, i32) {
    %c0_i32 = arith.constant 0 : i32
    return %arg0, %arg1 : i32, i32
  }
  func.func @transform_3(%arg0: i32, %arg1: i32) -> (i32, i32) {
    %c0_i32 = arith.constant 0 : i32
    %c0_i32_0 = arith.constant 0 : i32
    return %arg0, %c0_i32 : i32, i32
  }
  func.func @transform_4(%arg0: i32, %arg1: i32) -> (i32, i32) {
    %c0_i32 = arith.constant 0 : i32
    %c0_i32_0 = arith.constant 0 : i32
    return %arg0, %c0_i32 : i32, i32
  }
  func.func @transform_5(%arg0: i32, %arg1: i32) -> (i32, i32) {
    %c0_i32 = arith.constant 0 : i32
    %c0_i32_0 = arith.constant 0 : i32
    return %arg0, %c0_i32 : i32, i32
  }
}

</mosaic_0001>

<llo_original>
// kernel: tpu_custom_call.1
$region0: #{tpu_custom_call.1}
  #allocation0 [shape = 'u32[]', space=smem, size = 0x4, offset = 0x4, fixed_abs, tag = 'smem constant byte address 0x4 - core index']
  #allocation1 [shape = 'u32[144,128]{1,0:T(1,128)}', space=vmem, size = 0x12000, scoped, tag = 'internal scratch']
  %s0 = inlined_call_operand.vmem [shape: f32[256,1], index: 0, kind: input, shape index: {}]
  %s1 = inlined_call_operand.vmem [shape: bf16[256,256], index: 1, kind: input, shape index: {}]
  %s2 = inlined_call_operand.vmem [shape: bf16[144,256], index: 2, kind: input, shape index: {}]
  %s3 = inlined_call_operand.vmem [shape: f32[144,1], index: 3, kind: input, shape index: {}]
  %s4 = inlined_call_operand.vmem [shape: f32[144,1], index: 4, kind: input, shape index: {}]
  %s5 = inlined_call_operand.hbm [shape: f32[144,256], index: 5, kind: output, shape index: {}]
  %s6 = sld [smem:[#allocation0]]
  $region65: #{tpu_custom_call.1} parent=0
    _
  %s8 = ssub.s32 1, %s6
  %s9 = scalar_select 0, %s8, %s6
  $region1: #{tpu_custom_call.1} parent=0
    #allocation2 [shape = 'u8[98304]{0}', space=vmem, size = 0x18000, scoped, tag = 'output window, operand 0']
    #allocation3 [shape = 's32[2]{0}', space=sflag, size = 0x8, scoped, tag = 'scoped memory for tpu_custom_call.1']
    %10 = vsyncpa [#allocation3], 0
    %s11 = scalar_lea.sflag [#allocation3], 1
    %12 = vsyncpa %s11, 0
    loop: start=0, step=1, limit=5
    $region2: #{tpu_custom_call.1} parent=1 // loop_pre_header
      _
    $region3: #{tpu_custom_call.1} parent=1 // loop_header
      %s14 = sphi 0, %s18
      %p15 = scmp.ge.s32.totalorder %s14, 5
      %s21 = sphi 0, %s33
      %s22 = sphi 0, %s29
      %s23 = sphi 0, %s21
      %s24 = sphi 0, %s22
      %s25 = sphi 0, %s23
      %s26 = sphi 0, %s24
      %s36 = sphi 0, %s38
      %s39 = sphi 0, %s36
      %s40 = sphi 0, %s39
      %s56 = sphi 0, %s40
      %s62 = sphi 0, %s64
      %s65 = sphi 0, %s62
      %s66 = sphi 0, %s65
      %s82 = sphi 0, %s66
      %s90 = sphi 0, %s92
      %s93 = sphi 0, %s90
      %s94 = sphi 0, %s93
      %s110 = sphi 0, %s94
      %s116 = sphi 0, %s118
      %s119 = sphi 0, %s116
      %s120 = sphi 0, %s119
      %s136 = sphi 0, %s120
      %s142 = sphi 0, %s144
      %s145 = sphi 0, %s142
      %s146 = sphi 0, %s145
      %s162 = sphi 0, %s146
      %s168 = sphi 0, %s170
      %s171 = sphi 0, %s168
      %s172 = sphi 0, %s171
      %s188 = sphi 0, %s172
    $region4: #{tpu_custom_call.1} parent=1 // loop_header_branch
      %17 = sbr.rel (%p15) target = $region8
    $region5: #{tpu_custom_call.1} parent=1 // loop_body
      %s19 = ssub.s32 %s14, 1
      %s20 = ssub.s32 %s14, 2
      %s27 = sadd.s32 1, %s22
      %p28 = scmp.ge.s32.totalorder %s27, 1
      %s29 = scalar_select %p28, 0, %s27
      %s30 = sadd.s32 1, %s21
      %s31 = scalar_select %p28, %s30, %s21
      %p32 = scmp.ge.s32.totalorder %s31, 3
      %s33 = scalar_select %p32, 0, %s31
      %s34 = ssub.s32 %s22, %s29
      %p35 = scmp.eq.s32.totalorder %s34, 0
      %s37 = sadd.s32 %s36, 1
      %s38 = scalar_select %p35, %s36, %s37
      %p41 = pneg %p35
      %p42 = scmp.eq.s32.totalorder %s14, 2
      %p43 = por %p41, %p42
      %p44 = scmp.ne.s32.totalorder %s36, %s39
      %p45 = scmp.eq.s32.totalorder %s14, 0
      %p46 = por %p44, %p45
      %p47 = scmp.ne.s32.totalorder %s36, %s39
      %p48 = scmp.eq.s32.totalorder %s19, 2
      %p49 = por %p47, %p48
      %p50 = scmp.ne.s32.totalorder %s39, %s40
      %p51 = scmp.eq.s32.totalorder %s19, 0
      %p52 = por %p50, %p51
      %p53 = scmp.ne.s32.totalorder %s39, %s40
      %p54 = scmp.eq.s32.totalorder %s20, 2
      %p55 = por %p53, %p54
      %p57 = scmp.ne.s32.totalorder %s40, %s56
      %p58 = scmp.eq.s32.totalorder %s20, 0
      %p59 = por %p57, %p58
      %s60 = ssub.s32 %s22, %s29
      %p61 = scmp.eq.s32.totalorder %s60, 0
      %s63 = sadd.s32 %s62, 1
      %s64 = scalar_select %p61, %s62, %s63
      %p67 = pneg %p61
      %p68 = scmp.eq.s32.totalorder %s14, 2
      %p69 = por %p67, %p68
      %p70 = scmp.ne.s32.totalorder %s62, %s65
      %p71 = scmp.eq.s32.totalorder %s14, 0
      %p72 = por %p70, %p71
      %p73 = scmp.ne.s32.totalorder %s62, %s65
      %p74 = scmp.eq.s32.totalorder %s19, 2
      %p75 = por %p73, %p74
      %p76 = scmp.ne.s32.totalorder %s65, %s66
      %p77 = scmp.eq.s32.totalorder %s19, 0
      %p78 = por %p76, %p77
      %p79 = scmp.ne.s32.totalorder %s65, %s66
      %p80 = scmp.eq.s32.totalorder %s20, 2
      %p81 = por %p79, %p80
      %p83 = scmp.ne.s32.totalorder %s66, %s82
      %p84 = scmp.eq.s32.totalorder %s20, 0
      %p85 = por %p83, %p84
      %s86 = ssub.s32 %s21, %s33
      %s87 = ssub.s32 %s22, %s29
      %s88 = sor.u32 %s86, %s87
      %p89 = scmp.eq.s32.totalorder %s88, 0
      %s91 = sadd.s32 %s90, 1
      %s92 = scalar_select %p89, %s90, %s91
      %p95 = pneg %p89
      %p96 = scmp.eq.s32.totalorder %s14, 2
      %p97 = por %p95, %p96
      %p98 = scmp.ne.s32.totalorder %s90, %s93
      %p99 = scmp.eq.s32.totalorder %s14, 0
      %p100 = por %p98, %p99
      %p101 = scmp.ne.s32.totalorder %s90, %s93
      %p102 = scmp.eq.s32.totalorder %s19, 2
      %p103 = por %p101, %p102
      %p104 = scmp.ne.s32.totalorder %s93, %s94
      %p105 = scmp.eq.s32.totalorder %s19, 0
      %p106 = por %p104, %p105
      %p107 = scmp.ne.s32.totalorder %s93, %s94
      %p108 = scmp.eq.s32.totalorder %s20, 2
      %p109 = por %p107, %p108
      %p111 = scmp.ne.s32.totalorder %s94, %s110
      %p112 = scmp.eq.s32.totalorder %s20, 0
      %p113 = por %p111, %p112
      %s114 = ssub.s32 %s21, %s33
      %p115 = scmp.eq.s32.totalorder %s114, 0
      %s117 = sadd.s32 %s116, 1
      %s118 = scalar_select %p115, %s116, %s117
      %p121 = pneg %p115
      %p122 = scmp.eq.s32.totalorder %s14, 2
      %p123 = por %p121, %p122
      %p124 = scmp.ne.s32.totalorder %s116, %s119
      %p125 = scmp.eq.s32.totalorder %s14, 0
      %p126 = por %p124, %p125
      %p127 = scmp.ne.s32.totalorder %s116, %s119
      %p128 = scmp.eq.s32.totalorder %s19, 2
      %p129 = por %p127, %p128
      %p130 = scmp.ne.s32.totalorder %s119, %s120
      %p131 = scmp.eq.s32.totalorder %s19, 0
      %p132 = por %p130, %p131
      %p133 = scmp.ne.s32.totalorder %s119, %s120
      %p134 = scmp.eq.s32.totalorder %s20, 2
      %p135 = por %p133, %p134
      %p137 = scmp.ne.s32.totalorder %s120, %s136
      %p138 = scmp.eq.s32.totalorder %s20, 0
      %p139 = por %p137, %p138
      %s140 = ssub.s32 %s21, %s33
      %p141 = scmp.eq.s32.totalorder %s140, 0
      %s143 = sadd.s32 %s142, 1
      %s144 = scalar_select %p141, %s142, %s143
      %p147 = pneg %p141
      %p148 = scmp.eq.s32.totalorder %s14, 2
      %p149 = por %p147, %p148
      %p150 = scmp.ne.s32.totalorder %s142, %s145
      %p151 = scmp.eq.s32.totalorder %s14, 0
      %p152 = por %p150, %p151
      %p153 = scmp.ne.s32.totalorder %s142, %s145
      %p154 = scmp.eq.s32.totalorder %s19, 2
      %p155 = por %p153, %p154
      %p156 = scmp.ne.s32.totalorder %s145, %s146
      %p157 = scmp.eq.s32.totalorder %s19, 0
      %p158 = por %p156, %p157
      %p159 = scmp.ne.s32.totalorder %s145, %s146
      %p160 = scmp.eq.s32.totalorder %s20, 2
      %p161 = por %p159, %p160
      %p163 = scmp.ne.s32.totalorder %s146, %s162
      %p164 = scmp.eq.s32.totalorder %s20, 0
      %p165 = por %p163, %p164
      %s166 = ssub.s32 %s21, %s33
      %p167 = scmp.eq.s32.totalorder %s166, 0
      %s169 = sadd.s32 %s168, 1
      %s170 = scalar_select %p167, %s168, %s169
      %p173 = pneg %p167
      %p174 = scmp.eq.s32.totalorder %s14, 2
      %p175 = por %p173, %p174
      %p176 = scmp.ne.s32.totalorder %s168, %s171
      %p177 = scmp.eq.s32.totalorder %s14, 0
      %p178 = por %p176, %p177
      %p179 = scmp.ne.s32.totalorder %s168, %s171
      %p180 = scmp.eq.s32.totalorder %s19, 2
      %p181 = por %p179, %p180
      %p182 = scmp.ne.s32.totalorder %s171, %s172
      %p183 = scmp.eq.s32.totalorder %s19, 0
      %p184 = por %p182, %p183
      %p185 = scmp.ne.s32.totalorder %s171, %s172
      %p186 = scmp.eq.s32.totalorder %s20, 2
      %p187 = por %p185, %p186
      %p189 = scmp.ne.s32.totalorder %s172, %s188
      %p190 = scmp.eq.s32.totalorder %s20, 0
      %p191 = por %p189, %p190
      %p192 = scmp.le.s32.totalorder 1, %s14
      %p193 = scmp.lt.s32.totalorder %s14, 4
      %p194 = pnand %p192, %p193
      %p195 = pneg %p194
      // Predicated region
      $region9: #{tpu_custom_call.1} parent=5 // pred_check
        _
      $region10: #{tpu_custom_call.1} parent=5 // pred_check_branch
        %197 = sbr.rel (%p194) target = $region12
      $region11: #{tpu_custom_call.1} parent=5 // pred_region
        %s198 = ssub.s32 %s14, 1
        // Predicated region
        $region13: #{tpu_custom_call.1} parent=11 // pred_check
          %p199 = pneg %p52
        $region14: #{tpu_custom_call.1} parent=11 // pred_check_branch
          %201 = sbr.rel (%p199) target = $region16
        $region15: #{tpu_custom_call.1} parent=11 // pred_region
          %s202 = smul.u32 32, %s24
          %p203 = scmp.lt.s32.totalorder %s202, 31
          %s204 = scalar_select %p203, %s202, 31
          %s205 = smul.addr %s204, 8
          %s206 = scalar_lea.vmem %s0, %s205
          %s207 = smul.u32 32, %s24
        $region16: #{tpu_custom_call.1} parent=11 // pred_fallthru
          _
        // Predicated region
        $region17: #{tpu_custom_call.1} parent=11 // pred_check
          %p208 = pneg %p78
        $region18: #{tpu_custom_call.1} parent=11 // pred_check_branch
          %210 = sbr.rel (%p208) target = $region20
        $region19: #{tpu_custom_call.1} parent=11 // pred_region
          %s211 = smul.u32 32, %s24
          %p212 = scmp.lt.s32.totalorder %s211, 31
          %s213 = scalar_select %p212, %s211, 31
          %s214 = smul.addr %s213, 2
          %s215 = smul.addr %s214, 4
          %s216 = scalar_lea.vmem %s1, %s215
          %s217 = smul.u32 32, %s24
        $region20: #{tpu_custom_call.1} parent=11 // pred_fallthru
          _
      $region12: #{tpu_custom_call.1} parent=5 // pred_fallthru
        _
      %p218 = scmp.lt.s32.totalorder %s14, 3
      // Predicated region
      $region21: #{tpu_custom_call.1} parent=5 // pred_check
        %p219 = pneg %p218
      $region22: #{tpu_custom_call.1} parent=5 // pred_check_branch
        %221 = sbr.rel (%p219) target = $region24
      $region23: #{tpu_custom_call.1} parent=5 // pred_region
        // Predicated region
        $region25: #{tpu_custom_call.1} parent=23 // pred_check
          %p222 = pneg %p100
        $region26: #{tpu_custom_call.1} parent=23 // pred_check_branch
          %224 = sbr.rel (%p222) target = $region28
        $region27: #{tpu_custom_call.1} parent=23 // pred_region
          %s225 = smul.u32 6, %s21
          %s226 = smul.u32 2, %s22
          %p227 = scmp.lt.s32.totalorder %s225, 17
          %s228 = scalar_select %p227, %s225, 17
          %p229 = scmp.lt.s32.totalorder %s226, 1
          %s230 = scalar_select %p229, %s226, 1
          %s231 = smul.addr %s228, 2
          %s232 = sadd.s32 %s230, %s231
          %s233 = smul.addr %s232, 4
          %s234 = scalar_lea.vmem %s2, %s233
          %s235 = smul.u32 6, %s21
          %s236 = smul.u32 2, %s22
        $region28: #{tpu_custom_call.1} parent=23 // pred_fallthru
          _
        // Predicated region
        $region29: #{tpu_custom_call.1} parent=23 // pred_check
          %p237 = pneg %p126
        $region30: #{tpu_custom_call.1} parent=23 // pred_check_branch
          %239 = sbr.rel (%p237) target = $region32
        $region31: #{tpu_custom_call.1} parent=23 // pred_region
          %s240 = smul.u32 6, %s21
          %p241 = scmp.lt.s32.totalorder %s240, 17
          %s242 = scalar_select %p241, %s240, 17
          %s243 = smul.addr %s242, 8
          %s244 = scalar_lea.vmem %s3, %s243
          %s245 = smul.u32 6, %s21
        $region32: #{tpu_custom_call.1} parent=23 // pred_fallthru
          _
        // Predicated region
        $region33: #{tpu_custom_call.1} parent=23 // pred_check
          %p246 = pneg %p152
        $region34: #{tpu_custom_call.1} parent=23 // pred_check_branch
          %248 = sbr.rel (%p246) target = $region36
        $region35: #{tpu_custom_call.1} parent=23 // pred_region
          %s249 = smul.u32 6, %s21
          %p250 = scmp.lt.s32.totalorder %s249, 17
          %s251 = scalar_select %p250, %s249, 17
          %s252 = smul.addr %s251, 8
          %s253 = scalar_lea.vmem %s4, %s252
          %s254 = smul.u32 6, %s21
        $region36: #{tpu_custom_call.1} parent=23 // pred_fallthru
          _
      $region24: #{tpu_custom_call.1} parent=5 // pred_fallthru
        _
      %p255 = scmp.le.s32.totalorder 1, %s14
      %p256 = scmp.lt.s32.totalorder %s14, 4
      %p257 = pnand %p255, %p256
      %p258 = pneg %p257
      // Predicated region
      $region37: #{tpu_custom_call.1} parent=5 // pred_check
        _
      $region38: #{tpu_custom_call.1} parent=5 // pred_check_branch
        %260 = sbr.rel (%p257) target = $region40
      $region39: #{tpu_custom_call.1} parent=5 // pred_region
        %s261 = ssub.s32 %s14, 1
        %s262 = smul.u32 32, %s24
        %p263 = scmp.lt.s32.totalorder %s262, 31
        %s264 = scalar_select %p263, %s262, 31
        %s265 = smul.addr %s264, 8
        %s266 = scalar_lea.vmem %s0, %s265
        %p267 = pneg %p52
        %p268 = pneg %p49
        %s269 = smul.u32 32, %s24
        %p270 = scmp.lt.s32.totalorder %s269, 31
        %s271 = scalar_select %p270, %s269, 31
        %s272 = smul.addr %s271, 2
        %s273 = smul.addr %s272, 4
        %s274 = scalar_lea.vmem %s1, %s273
        %p275 = pneg %p78
        %p276 = pneg %p75
        %s277 = smul.u32 6, %s23
        %s278 = smul.u32 2, %s24
        %p279 = scmp.lt.s32.totalorder %s277, 17
        %s280 = scalar_select %p279, %s277, 17
        %p281 = scmp.lt.s32.totalorder %s278, 1
        %s282 = scalar_select %p281, %s278, 1
        %s283 = smul.addr %s280, 2
        %s284 = sadd.s32 %s282, %s283
        %s285 = smul.addr %s284, 4
        %s286 = scalar_lea.vmem %s2, %s285
        %p287 = pneg %p106
        %p288 = pneg %p103
        %s289 = smul.u32 6, %s23
        %p290 = scmp.lt.s32.totalorder %s289, 17
        %s291 = scalar_select %p290, %s289, 17
        %s292 = smul.addr %s291, 8
        %s293 = scalar_lea.vmem %s3, %s292
        %p294 = pneg %p132
        %p295 = pneg %p129
        %s296 = smul.u32 6, %s23
        %p297 = scmp.lt.s32.totalorder %s296, 17
        %s298 = scalar_select %p297, %s296, 17
        %s299 = smul.addr %s298, 8
        %s300 = scalar_lea.vmem %s4, %s299
        %p301 = pneg %p158
        %p302 = pneg %p155
        %p303 = pneg %p184
        %p304 = pneg %p181
        %s305 = sand.u32 %s171, 1
        %s306 = scalar_lea.sflag [#allocation3], %s305
        %s307 = sand.u32 %s171, 1
        %s308 = smul.addr %s307, 96
        %s309 = scalar_lea.vmem [#allocation2], %s308
        %s310 = smul.u32 32, %s24
        %p311 = scmp.lt.s32.totalorder %s310, 31
        %s312 = scalar_select %p311, %s310, 31
        %s313 = smul.addr %s312, 8
        %s314 = scalar_lea.vmem %s0, %s313
        %s315 = smul.u32 32, %s24
        %s316 = smul.u32 32, %s24
        %p317 = scmp.lt.s32.totalorder %s316, 31
        %s318 = scalar_select %p317, %s316, 31
        %s319 = smul.addr %s318, 2
        %s320 = smul.addr %s319, 4
        %s321 = scalar_lea.vmem %s1, %s320
        %s322 = smul.u32 32, %s24
        %s323 = smul.u32 6, %s23
        %s324 = smul.u32 2, %s24
        %p325 = scmp.lt.s32.totalorder %s323, 17
        %s326 = scalar_select %p325, %s323, 17
        %p327 = scmp.lt.s32.totalorder %s324, 1
        %s328 = scalar_select %p327, %s324, 1
        %s329 = smul.addr %s326, 2
        %s330 = sadd.s32 %s328, %s329
        %s331 = smul.addr %s330, 4
        %s332 = scalar_lea.vmem %s2, %s331
        %s333 = smul.u32 6, %s23
        %s334 = smul.u32 2, %s24
        %s335 = smul.u32 6, %s23
        %p336 = scmp.lt.s32.totalorder %s335, 17
        %s337 = scalar_select %p336, %s335, 17
        %s338 = smul.addr %s337, 8
        %s339 = scalar_lea.vmem %s3, %s338
        %s340 = smul.u32 6, %s23
        %s341 = smul.u32 6, %s23
        %p342 = scmp.lt.s32.totalorder %s341, 17
        %s343 = scalar_select %p342, %s341, 17
        %s344 = smul.addr %s343, 8
        %s345 = scalar_lea.vmem %s4, %s344
        %s346 = smul.u32 6, %s23
        %s347 = smul.u32 6, %s23
        %v348 = vld [vmem:[%s314] sm:$0xff]
        %v349 = vld [vmem:[%s314 + $0x8] sm:$0xff]
        %v350 = vld [vmem:[%s314 + $0x10] sm:$0xff]
        %v351 = vld [vmem:[%s314 + $0x18] sm:$0xff]
        %v352 = vld [vmem:[%s314 + $0x20] sm:$0xff]
        %v353 = vld [vmem:[%s314 + $0x28] sm:$0xff]
        %v354 = vld [vmem:[%s314 + $0x30] sm:$0xff]
        %v355 = vld [vmem:[%s314 + $0x38] sm:$0xff]
        %v356 = vld [vmem:[%s314 + $0x40] sm:$0xff]
        %v357 = vld [vmem:[%s314 + $0x48] sm:$0xff]
        %v358 = vld [vmem:[%s314 + $0x50] sm:$0xff]
        %v359 = vld [vmem:[%s314 + $0x58] sm:$0xff]
        %v360 = vld [vmem:[%s314 + $0x60] sm:$0xff]
        %v361 = vld [vmem:[%s314 + $0x68] sm:$0xff]
        %v362 = vld [vmem:[%s314 + $0x70] sm:$0xff]
        %v363 = vld [vmem:[%s314 + $0x78] sm:$0xff]
        %v364 = vld [vmem:[%s314 + $0x80] sm:$0xff]
        %v365 = vld [vmem:[%s314 + $0x88] sm:$0xff]
        %v366 = vld [vmem:[%s314 + $0x90] sm:$0xff]
        %v367 = vld [vmem:[%s314 + $0x98] sm:$0xff]
        %v368 = vld [vmem:[%s314 + $0xa0] sm:$0xff]
        %v369 = vld [vmem:[%s314 + $0xa8] sm:$0xff]
        %v370 = vld [vmem:[%s314 + $0xb0] sm:$0xff]
        %v371 = vld [vmem:[%s314 + $0xb8] sm:$0xff]
        %v372 = vld [vmem:[%s314 + $0xc0] sm:$0xff]
        %v373 = vld [vmem:[%s314 + $0xc8] sm:$0xff]
        %v374 = vld [vmem:[%s314 + $0xd0] sm:$0xff]
        %v375 = vld [vmem:[%s314 + $0xd8] sm:$0xff]
        %v376 = vld [vmem:[%s314 + $0xe0] sm:$0xff]
        %v377 = vld [vmem:[%s314 + $0xe8] sm:$0xff]
        %v378 = vld [vmem:[%s314 + $0xf0] sm:$0xff]
        %v379 = vld [vmem:[%s314 + $0xf8] sm:$0xff]
        %v380 = vld [vmem:[%s321] sm:$0xff]
        %v381 = vld [vmem:[%s321 + $0x8] sm:$0xff]
        %v382 = vld [vmem:[%s321 + $0x10] sm:$0xff]
        %v383 = vld [vmem:[%s321 + $0x18] sm:$0xff]
        %v384 = vld [vmem:[%s321 + $0x20] sm:$0xff]
        %v385 = vld [vmem:[%s321 + $0x28] sm:$0xff]
        %v386 = vld [vmem:[%s321 + $0x30] sm:$0xff]
        %v387 = vld [vmem:[%s321 + $0x38] sm:$0xff]
        %v388 = vld [vmem:[%s321 + $0x40] sm:$0xff]
        %v389 = vld [vmem:[%s321 + $0x48] sm:$0xff]
        %v390 = vld [vmem:[%s321 + $0x50] sm:$0xff]
        %v391 = vld [vmem:[%s321 + $0x58] sm:$0xff]
        %v392 = vld [vmem:[%s321 + $0x60] sm:$0xff]
        %v393 = vld [vmem:[%s321 + $0x68] sm:$0xff]
        %v394 = vld [vmem:[%s321 + $0x70] sm:$0xff]
        %v395 = vld [vmem:[%s321 + $0x78] sm:$0xff]
        %v396 = vld [vmem:[%s321 + $0x80] sm:$0xff]
        %v397 = vld [vmem:[%s321 + $0x88] sm:$0xff]
        %v398 = vld [vmem:[%s321 + $0x90] sm:$0xff]
        %v399 = vld [vmem:[%s321 + $0x98] sm:$0xff]
        %v400 = vld [vmem:[%s321 + $0xa0] sm:$0xff]
        %v401 = vld [vmem:[%s321 + $0xa8] sm:$0xff]
        %v402 = vld [vmem:[%s321 + $0xb0] sm:$0xff]
        %v403 = vld [vmem:[%s321 + $0xb8] sm:$0xff]
        %v404 = vld [vmem:[%s321 + $0xc0] sm:$0xff]
        %v405 = vld [vmem:[%s321 + $0xc8] sm:$0xff]
        %v406 = vld [vmem:[%s321 + $0xd0] sm:$0xff]
        %v407 = vld [vmem:[%s321 + $0xd8] sm:$0xff]
        %v408 = vld [vmem:[%s321 + $0xe0] sm:$0xff]
        %v409 = vld [vmem:[%s321 + $0xe8] sm:$0xff]
        %v410 = vld [vmem:[%s321 + $0xf0] sm:$0xff]
        %v411 = vld [vmem:[%s321 + $0xf8] sm:$0xff]
        %v412 = vunpack.c.l.bf16 %v380
        %v413 = vunpack.c.h.bf16 %v380
        %v414 = vunpack.c.l.bf16 %v381
        %v415 = vunpack.c.h.bf16 %v381
        %v416 = vunpack.c.l.bf16 %v382
        %v417 = vunpack.c.h.bf16 %v382
        %v418 = vunpack.c.l.bf16 %v383
        %v419 = vunpack.c.h.bf16 %v383
        %v420 = vunpack.c.l.bf16 %v384
        %v421 = vunpack.c.h.bf16 %v384
        %v422 = vunpack.c.l.bf16 %v385
        %v423 = vunpack.c.h.bf16 %v385
        %v424 = vunpack.c.l.bf16 %v386
        %v425 = vunpack.c.h.bf16 %v386
        %v426 = vunpack.c.l.bf16 %v387
        %v427 = vunpack.c.h.bf16 %v387
        %v428 = vunpack.c.l.bf16 %v388
        %v429 = vunpack.c.h.bf16 %v388
        %v430 = vunpack.c.l.bf16 %v389
        %v431 = vunpack.c.h.bf16 %v389
        %v432 = vunpack.c.l.bf16 %v390
        %v433 = vunpack.c.h.bf16 %v390
        %v434 = vunpack.c.l.bf16 %v391
        %v435 = vunpack.c.h.bf16 %v391
        %v436 = vunpack.c.l.bf16 %v392
        %v437 = vunpack.c.h.bf16 %v392
        %v438 = vunpack.c.l.bf16 %v393
        %v439 = vunpack.c.h.bf16 %v393
        %v440 = vunpack.c.l.bf16 %v394
        %v441 = vunpack.c.h.bf16 %v394
        %v442 = vunpack.c.l.bf16 %v395
        %v443 = vunpack.c.h.bf16 %v395
        %v444 = vunpack.c.l.bf16 %v396
        %v445 = vunpack.c.h.bf16 %v396
        %v446 = vunpack.c.l.bf16 %v397
        %v447 = vunpack.c.h.bf16 %v397
        %v448 = vunpack.c.l.bf16 %v398
        %v449 = vunpack.c.h.bf16 %v398
        %v450 = vunpack.c.l.bf16 %v399
        %v451 = vunpack.c.h.bf16 %v399
        %v452 = vunpack.c.l.bf16 %v400
        %v453 = vunpack.c.h.bf16 %v400
        %v454 = vunpack.c.l.bf16 %v401
        %v455 = vunpack.c.h.bf16 %v401
        %v456 = vunpack.c.l.bf16 %v402
        %v457 = vunpack.c.h.bf16 %v402
        %v458 = vunpack.c.l.bf16 %v403
        %v459 = vunpack.c.h.bf16 %v403
        %v460 = vunpack.c.l.bf16 %v404
        %v461 = vunpack.c.h.bf16 %v404
        %v462 = vunpack.c.l.bf16 %v405
        %v463 = vunpack.c.h.bf16 %v405
        %v464 = vunpack.c.l.bf16 %v406
        %v465 = vunpack.c.h.bf16 %v406
        %v466 = vunpack.c.l.bf16 %v407
        %v467 = vunpack.c.h.bf16 %v407
        %v468 = vunpack.c.l.bf16 %v408
        %v469 = vunpack.c.h.bf16 %v408
        %v470 = vunpack.c.l.bf16 %v409
        %v471 = vunpack.c.h.bf16 %v409
        %v472 = vunpack.c.l.bf16 %v410
        %v473 = vunpack.c.h.bf16 %v410
        %v474 = vunpack.c.l.bf16 %v411
        %v475 = vunpack.c.h.bf16 %v411
        %477 = vset.pattern.permute.xlu0 0
        %478 = vperm.xlu0 %477, %v348
        %v479 = vpop.permute.xlu0 %478
        %482 = vset.pattern.permute.xlu0 0
        %483 = vperm.xlu0 %482, %v349
        %v484 = vpop.permute.xlu0 %483
        %487 = vset.pattern.permute.xlu0 0
        %488 = vperm.xlu0 %487, %v350
        %v489 = vpop.permute.xlu0 %488
        %492 = vset.pattern.permute.xlu0 0
        %493 = vperm.xlu0 %492, %v351
        %v494 = vpop.permute.xlu0 %493
        %497 = vset.pattern.permute.xlu0 0
        %498 = vperm.xlu0 %497, %v352
        %v499 = vpop.permute.xlu0 %498
        %502 = vset.pattern.permute.xlu0 0
        %503 = vperm.xlu0 %502, %v353
        %v504 = vpop.permute.xlu0 %503
        %507 = vset.pattern.permute.xlu0 0
        %508 = vperm.xlu0 %507, %v354
        %v509 = vpop.permute.xlu0 %508
        %512 = vset.pattern.permute.xlu0 0
        %513 = vperm.xlu0 %512, %v355
        %v514 = vpop.permute.xlu0 %513
        %517 = vset.pattern.permute.xlu0 0
        %518 = vperm.xlu0 %517, %v356
        %v519 = vpop.permute.xlu0 %518
        %522 = vset.pattern.permute.xlu0 0
        %523 = vperm.xlu0 %522, %v357
        %v524 = vpop.permute.xlu0 %523
        %527 = vset.pattern.permute.xlu0 0
        %528 = vperm.xlu0 %527, %v358
        %v529 = vpop.permute.xlu0 %528
        %532 = vset.pattern.permute.xlu0 0
        %533 = vperm.xlu0 %532, %v359
        %v534 = vpop.permute.xlu0 %533
        %537 = vset.pattern.permute.xlu0 0
        %538 = vperm.xlu0 %537, %v360
        %v539 = vpop.permute.xlu0 %538
        %542 = vset.pattern.permute.xlu0 0
        %543 = vperm.xlu0 %542, %v361
        %v544 = vpop.permute.xlu0 %543
        %547 = vset.pattern.permute.xlu0 0
        %548 = vperm.xlu0 %547, %v362
        %v549 = vpop.permute.xlu0 %548
        %552 = vset.pattern.permute.xlu0 0
        %553 = vperm.xlu0 %552, %v363
        %v554 = vpop.permute.xlu0 %553
        %557 = vset.pattern.permute.xlu0 0
        %558 = vperm.xlu0 %557, %v364
        %v559 = vpop.permute.xlu0 %558
        %562 = vset.pattern.permute.xlu0 0
        %563 = vperm.xlu0 %562, %v365
        %v564 = vpop.permute.xlu0 %563
        %567 = vset.pattern.permute.xlu0 0
        %568 = vperm.xlu0 %567, %v366
        %v569 = vpop.permute.xlu0 %568
        %572 = vset.pattern.permute.xlu0 0
        %573 = vperm.xlu0 %572, %v367
        %v574 = vpop.permute.xlu0 %573
        %577 = vset.pattern.permute.xlu0 0
        %578 = vperm.xlu0 %577, %v368
        %v579 = vpop.permute.xlu0 %578
        %582 = vset.pattern.permute.xlu0 0
        %583 = vperm.xlu0 %582, %v369
        %v584 = vpop.permute.xlu0 %583
        %587 = vset.pattern.permute.xlu0 0
        %588 = vperm.xlu0 %587, %v370
        %v589 = vpop.permute.xlu0 %588
        %592 = vset.pattern.permute.xlu0 0
        %593 = vperm.xlu0 %592, %v371
        %v594 = vpop.permute.xlu0 %593
        %597 = vset.pattern.permute.xlu0 0
        %598 = vperm.xlu0 %597, %v372
        %v599 = vpop.permute.xlu0 %598
        %602 = vset.pattern.permute.xlu0 0
        %603 = vperm.xlu0 %602, %v373
        %v604 = vpop.permute.xlu0 %603
        %607 = vset.pattern.permute.xlu0 0
        %608 = vperm.xlu0 %607, %v374
        %v609 = vpop.permute.xlu0 %608
        %612 = vset.pattern.permute.xlu0 0
        %613 = vperm.xlu0 %612, %v375
        %v614 = vpop.permute.xlu0 %613
        %617 = vset.pattern.permute.xlu0 0
        %618 = vperm.xlu0 %617, %v376
        %v619 = vpop.permute.xlu0 %618
        %622 = vset.pattern.permute.xlu0 0
        %623 = vperm.xlu0 %622, %v377
        %v624 = vpop.permute.xlu0 %623
        %627 = vset.pattern.permute.xlu0 0
        %628 = vperm.xlu0 %627, %v378
        %v629 = vpop.permute.xlu0 %628
        %632 = vset.pattern.permute.xlu0 0
        %633 = vperm.xlu0 %632, %v379
        %v634 = vpop.permute.xlu0 %633
        %v636 = vmul.f32 %v479, %v412
        %v637 = vmul.f32 %v479, %v413
        %v638 = vmul.f32 %v484, %v414
        %v639 = vmul.f32 %v484, %v415
        %v640 = vmul.f32 %v489, %v416
        %v641 = vmul.f32 %v489, %v417
        %v642 = vmul.f32 %v494, %v418
        %v643 = vmul.f32 %v494, %v419
        %v644 = vmul.f32 %v499, %v420
        %v645 = vmul.f32 %v499, %v421
        %v646 = vmul.f32 %v504, %v422
        %v647 = vmul.f32 %v504, %v423
        %v648 = vmul.f32 %v509, %v424
        %v649 = vmul.f32 %v509, %v425
        %v650 = vmul.f32 %v514, %v426
        %v651 = vmul.f32 %v514, %v427
        %v652 = vmul.f32 %v519, %v428
        %v653 = vmul.f32 %v519, %v429
        %v654 = vmul.f32 %v524, %v430
        %v655 = vmul.f32 %v524, %v431
        %v656 = vmul.f32 %v529, %v432
        %v657 = vmul.f32 %v529, %v433
        %v658 = vmul.f32 %v534, %v434
        %v659 = vmul.f32 %v534, %v435
        %v660 = vmul.f32 %v539, %v436
        %v661 = vmul.f32 %v539, %v437
        %v662 = vmul.f32 %v544, %v438
        %v663 = vmul.f32 %v544, %v439
        %v664 = vmul.f32 %v549, %v440
        %v665 = vmul.f32 %v549, %v441
        %v666 = vmul.f32 %v554, %v442
        %v667 = vmul.f32 %v554, %v443
        %v668 = vmul.f32 %v559, %v444
        %v669 = vmul.f32 %v559, %v445
        %v670 = vmul.f32 %v564, %v446
        %v671 = vmul.f32 %v564, %v447
        %v672 = vmul.f32 %v569, %v448
        %v673 = vmul.f32 %v569, %v449
        %v674 = vmul.f32 %v574, %v450
        %v675 = vmul.f32 %v574, %v451
        %v676 = vmul.f32 %v579, %v452
        %v677 = vmul.f32 %v579, %v453
        %v678 = vmul.f32 %v584, %v454
        %v679 = vmul.f32 %v584, %v455
        %v680 = vmul.f32 %v589, %v456
        %v681 = vmul.f32 %v589, %v457
        %v682 = vmul.f32 %v594, %v458
        %v683 = vmul.f32 %v594, %v459
        %v684 = vmul.f32 %v599, %v460
        %v685 = vmul.f32 %v599, %v461
        %v686 = vmul.f32 %v604, %v462
        %v687 = vmul.f32 %v604, %v463
        %v688 = vmul.f32 %v609, %v464
        %v689 = vmul.f32 %v609, %v465
        %v690 = vmul.f32 %v614, %v466
        %v691 = vmul.f32 %v614, %v467
        %v692 = vmul.f32 %v619, %v468
        %v693 = vmul.f32 %v619, %v469
        %v694 = vmul.f32 %v624, %v470
        %v695 = vmul.f32 %v624, %v471
        %v696 = vmul.f32 %v629, %v472
        %v697 = vmul.f32 %v629, %v473
        %v698 = vmul.f32 %v634, %v474
        %v699 = vmul.f32 %v634, %v475
        %v700 = vpack.c.bf16 %v638, %v636
        %v701 = vpack.c.bf16 %v639, %v637
        %v702 = vpack.c.bf16 %v642, %v640
        %v703 = vpack.c.bf16 %v643, %v641
        %v704 = vpack.c.bf16 %v646, %v644
        %v705 = vpack.c.bf16 %v647, %v645
        %v706 = vpack.c.bf16 %v650, %v648
        %v707 = vpack.c.bf16 %v651, %v649
        %v708 = vpack.c.bf16 %v654, %v652
        %v709 = vpack.c.bf16 %v655, %v653
        %v710 = vpack.c.bf16 %v658, %v656
        %v711 = vpack.c.bf16 %v659, %v657
        %v712 = vpack.c.bf16 %v662, %v660
        %v713 = vpack.c.bf16 %v663, %v661
        %v714 = vpack.c.bf16 %v666, %v664
        %v715 = vpack.c.bf16 %v667, %v665
        %v716 = vpack.c.bf16 %v670, %v668
        %v717 = vpack.c.bf16 %v671, %v669
        %v718 = vpack.c.bf16 %v674, %v672
        %v719 = vpack.c.bf16 %v675, %v673
        %v720 = vpack.c.bf16 %v678, %v676
        %v721 = vpack.c.bf16 %v679, %v677
        %v722 = vpack.c.bf16 %v682, %v680
        %v723 = vpack.c.bf16 %v683, %v681
        %v724 = vpack.c.bf16 %v686, %v684
        %v725 = vpack.c.bf16 %v687, %v685
        %v726 = vpack.c.bf16 %v690, %v688
        %v727 = vpack.c.bf16 %v691, %v689
        %v728 = vpack.c.bf16 %v694, %v692
        %v729 = vpack.c.bf16 %v695, %v693
        %v730 = vpack.c.bf16 %v698, %v696
        %v731 = vpack.c.bf16 %v699, %v697
        %v732 = vld [vmem:[%s332] sm:$0xff]
        %v733 = vld [vmem:[%s332 + $0x8] sm:$0xff]
        %v734 = vld [vmem:[%s332 + $0x10] sm:$0xff]
        %v735 = vld [vmem:[%s332 + $0x18] sm:$0xff]
        %v736 = vld [vmem:[%s332 + $0x20] sm:$0xff]
        %v737 = vld [vmem:[%s332 + $0x28] sm:$0xff]
        %v744 = vunpack.c.l.b16 %v732
        %v745 = vunpack.c.h.b16 %v732
        %v746 = vunpack.c.l.b16 %v733
        %v747 = vunpack.c.h.b16 %v733
        %v748 = vunpack.c.l.b16 %v734
        %v749 = vunpack.c.h.b16 %v734
        %v750 = vunpack.c.l.b16 %v735
        %v751 = vunpack.c.h.b16 %v735
        %v752 = vunpack.c.l.b16 %v736
        %v753 = vunpack.c.h.b16 %v736
        %v754 = vunpack.c.l.b16 %v737
        %v755 = vunpack.c.h.b16 %v737
        %v756 = vpack.c.b16 %v746, %v744
        %v757 = vpack.c.b16 %v747, %v745
        %v758 = vpack.c.b16 %v750, %v748
        %v759 = vpack.c.b16 %v751, %v749
        %v760 = vpack.c.b16 %v754, %v752
        %v761 = vpack.c.b16 %v755, %v753
        %768 = vmatprep.subr.bf16.mxu0 %v715
        %769 = vmatpush1.bf16.msra.mxu0 %v714
        %770 = vmatprep.subr.bf16.mxu0 %v713
        %771 = vmatpush1.bf16.msra.mxu0 %v712
        %772 = vmatprep.subr.bf16.mxu0 %v711
        %773 = vmatpush1.bf16.msra.mxu0 %v710
        %774 = vmatprep.subr.bf16.mxu0 %v709
        %775 = vmatpush1.bf16.msra.mxu0 %v708
        %776 = vmatprep.subr.bf16.mxu0 %v707
        %777 = vmatpush1.bf16.msra.mxu0 %v706
        %778 = vmatprep.subr.bf16.mxu0 %v705
        %779 = vmatpush1.bf16.msra.mxu0 %v704
        %780 = vmatprep.subr.bf16.mxu0 %v703
        %781 = vmatpush1.bf16.msra.mxu0 %v702
        %782 = vmatprep.subr.bf16.mxu0 %v701
        %783 = vmatpush1.bf16.msra.mxu0 %v700
        %784 = vmatprep.subr.bf16.mxu0 %v731
        %785 = vmatpush2.bf16.msra.mxu0 %v730
        %786 = vmatprep.subr.bf16.mxu0 %v729
        %787 = vmatpush2.bf16.msra.mxu0 %v728
        %788 = vmatprep.subr.bf16.mxu0 %v727
        %789 = vmatpush2.bf16.msra.mxu0 %v726
        %790 = vmatprep.subr.bf16.mxu0 %v725
        %791 = vmatpush2.bf16.msra.mxu0 %v724
        %792 = vmatprep.subr.bf16.mxu0 %v723
        %793 = vmatpush2.bf16.msra.mxu0 %v722
        %794 = vmatprep.subr.bf16.mxu0 %v721
        %795 = vmatpush2.bf16.msra.mxu0 %v720
        %796 = vmatprep.subr.bf16.mxu0 %v719
        %797 = vmatpush2.bf16.msra.mxu0 %v718
        %798 = vmatprep.subr.bf16.mxu0 %v717
        %799 = vmatpush2.bf16.msra.mxu0 %v716
        %800 = vmatprep.mubr.bf16.mxu0 %v757
        %801 = vmatmul.mubr.bf16.gmra.mxu0 %v756
        %v802 = vpop.f32.mrf.mxu0
        %v803 = vadd.f32 0.0, %v802
        %v804 = vpop.f32.mrf.mxu0
        %v805 = vadd.f32 0.0, %v804
        %v806 = vpop.f32.mrf.mxu0
        %v807 = vadd.f32 0.0, %v806
        %v808 = vpop.f32.mrf.mxu0
        %v809 = vadd.f32 0.0, %v808
        %810 = vmatprep.mubr.bf16.mxu0 %v759
        %811 = vmatmul.mubr.bf16.gmra.mxu0 %v758
        %v812 = vpop.f32.mrf.mxu0
        %v813 = vadd.f32 0.0, %v812
        %v814 = vpop.f32.mrf.mxu0
        %v815 = vadd.f32 0.0, %v814
        %v816 = vpop.f32.mrf.mxu0
        %v817 = vadd.f32 0.0, %v816
        %v818 = vpop.f32.mrf.mxu0
        %v819 = vadd.f32 0.0, %v818
        %820 = vmatprep.mubr.bf16.mxu0 %v761
        %821 = vmatmul.mubr.bf16.gmra.mxu0 %v760
        %v822 = vpop.f32.mrf.mxu0
        %v823 = vadd.f32 0.0, %v822
        %v824 = vpop.f32.mrf.mxu0
        %v825 = vadd.f32 0.0, %v824
        %v826 = vpop.f32.mrf.mxu0
        %v827 = vadd.f32 0.0, %v826
        %v828 = vpop.f32.mrf.mxu0
        %v829 = vadd.f32 0.0, %v828
        %830 = vdwg.mxu0
        %p831 = scmp.eq.s32.totalorder %s24, 0
        // Predicated region
        $region41: #{tpu_custom_call.1} parent=39 // pred_check
          %p832 = pneg %p831
        $region42: #{tpu_custom_call.1} parent=39 // pred_check_branch
          %834 = sbr.rel (%p832) target = $region44
        $region43: #{tpu_custom_call.1} parent=39 // pred_region
          %835 = vst [vmem:[%s309] sm:$0xff] %v803
          %836 = vst [vmem:[%s309 + $0x8] sm:$0xff] %v805
          %837 = vst [vmem:[%s309 + $0x10] sm:$0xff] %v807
          %838 = vst [vmem:[%s309 + $0x18] sm:$0xff] %v809
          %839 = vst [vmem:[%s309 + $0x20] sm:$0xff] %v813
          %840 = vst [vmem:[%s309 + $0x28] sm:$0xff] %v815
          %841 = vst [vmem:[%s309 + $0x30] sm:$0xff] %v817
          %842 = vst [vmem:[%s309 + $0x38] sm:$0xff] %v819
          %843 = vst [vmem:[%s309 + $0x40] sm:$0xff] %v823
          %844 = vst [vmem:[%s309 + $0x48] sm:$0xff] %v825
          %845 = vst [vmem:[%s309 + $0x50] sm:$0xff] %v827
          %846 = vst [vmem:[%s309 + $0x58] sm:$0xff] %v829
        $region44: #{tpu_custom_call.1} parent=39 // pred_fallthru
          _
        %p847 = scmp.ne.s32.totalorder %s24, 0
        // Predicated region
        $region45: #{tpu_custom_call.1} parent=39 // pred_check
          %p848 = pneg %p847
        $region46: #{tpu_custom_call.1} parent=39 // pred_check_branch
          %850 = sbr.rel (%p848) target = $region48
        $region47: #{tpu_custom_call.1} parent=39 // pred_region
          %v851 = vld [vmem:[%s309] sm:$0xff]
          %v852 = vld [vmem:[%s309 + $0x8] sm:$0xff]
          %v853 = vld [vmem:[%s309 + $0x10] sm:$0xff]
          %v854 = vld [vmem:[%s309 + $0x18] sm:$0xff]
          %v855 = vld [vmem:[%s309 + $0x20] sm:$0xff]
          %v856 = vld [vmem:[%s309 + $0x28] sm:$0xff]
          %v857 = vld [vmem:[%s309 + $0x30] sm:$0xff]
          %v858 = vld [vmem:[%s309 + $0x38] sm:$0xff]
          %v859 = vld [vmem:[%s309 + $0x40] sm:$0xff]
          %v860 = vld [vmem:[%s309 + $0x48] sm:$0xff]
          %v861 = vld [vmem:[%s309 + $0x50] sm:$0xff]
          %v862 = vld [vmem:[%s309 + $0x58] sm:$0xff]
          %v863 = vadd.f32 %v851, %v803
          %v864 = vadd.f32 %v852, %v805
          %v865 = vadd.f32 %v853, %v807
          %v866 = vadd.f32 %v854, %v809
          %v867 = vadd.f32 %v855, %v813
          %v868 = vadd.f32 %v856, %v815
          %v869 = vadd.f32 %v857, %v817
          %v870 = vadd.f32 %v858, %v819
          %v871 = vadd.f32 %v859, %v823
          %v872 = vadd.f32 %v860, %v825
          %v873 = vadd.f32 %v861, %v827
          %v874 = vadd.f32 %v862, %v829
          %875 = vst [vmem:[%s309] sm:$0xff] %v863
          %876 = vst [vmem:[%s309 + $0x8] sm:$0xff] %v864
          %877 = vst [vmem:[%s309 + $0x10] sm:$0xff] %v865
          %878 = vst [vmem:[%s309 + $0x18] sm:$0xff] %v866
          %879 = vst [vmem:[%s309 + $0x20] sm:$0xff] %v867
          %880 = vst [vmem:[%s309 + $0x28] sm:$0xff] %v868
          %881 = vst [vmem:[%s309 + $0x30] sm:$0xff] %v869
          %882 = vst [vmem:[%s309 + $0x38] sm:$0xff] %v870
          %883 = vst [vmem:[%s309 + $0x40] sm:$0xff] %v871
          %884 = vst [vmem:[%s309 + $0x48] sm:$0xff] %v872
          %885 = vst [vmem:[%s309 + $0x50] sm:$0xff] %v873
          %886 = vst [vmem:[%s309 + $0x58] sm:$0xff] %v874
        $region48: #{tpu_custom_call.1} parent=39 // pred_fallthru
          _
        // Predicated region
        $region49: #{tpu_custom_call.1} parent=39 // pred_check
          %p887 = pneg %p831
        $region50: #{tpu_custom_call.1} parent=39 // pred_check_branch
          %889 = sbr.rel (%p887) target = $region52
        $region51: #{tpu_custom_call.1} parent=39 // pred_region
          %v890 = vld [vmem:[%s309] sm:$0xff]
          %v891 = vld [vmem:[%s309 + $0x8] sm:$0xff]
          %v892 = vld [vmem:[%s309 + $0x10] sm:$0xff]
          %v893 = vld [vmem:[%s309 + $0x18] sm:$0xff]
          %v894 = vld [vmem:[%s309 + $0x20] sm:$0xff]
          %v895 = vld [vmem:[%s309 + $0x28] sm:$0xff]
          %v896 = vld [vmem:[%s309 + $0x30] sm:$0xff]
          %v897 = vld [vmem:[%s309 + $0x38] sm:$0xff]
          %v898 = vld [vmem:[%s309 + $0x40] sm:$0xff]
          %v899 = vld [vmem:[%s309 + $0x48] sm:$0xff]
          %v900 = vld [vmem:[%s309 + $0x50] sm:$0xff]
          %v901 = vld [vmem:[%s309 + $0x58] sm:$0xff]
          %v902 = vadd.f32 %v890, %v891
          %903 = vadd.xlane.f32.xlu0 %v902
          %v904 = vpop.xlane.xlu0 %903
          %v905 = vadd.f32 %v892, %v893
          %906 = vadd.xlane.f32.xlu0 %v905
          %v907 = vpop.xlane.xlu0 %906
          %v908 = vadd.f32 %v894, %v895
          %909 = vadd.xlane.f32.xlu0 %v908
          %v910 = vpop.xlane.xlu0 %909
          %v911 = vadd.f32 %v896, %v897
          %912 = vadd.xlane.f32.xlu0 %v911
          %v913 = vpop.xlane.xlu0 %912
          %v914 = vadd.f32 %v898, %v899
          %915 = vadd.xlane.f32.xlu0 %v914
          %v916 = vpop.xlane.xlu0 %915
          %v917 = vadd.f32 %v900, %v901
          %918 = vadd.xlane.f32.xlu0 %v917
          %v919 = vpop.xlane.xlu0 %918
          %v920 = vmul.f32 %v904, 0.0051020407
          %v921 = vmul.f32 %v907, 0.0051020407
          %v922 = vmul.f32 %v910, 0.0051020407
          %v923 = vmul.f32 %v913, 0.0051020407
          %v924 = vmul.f32 %v916, 0.0051020407
          %v925 = vmul.f32 %v919, 0.0051020407
          %v926 = vlaneseq
          %v927 = vand.u32 %v926, 127
          %v928 = vadd.s32 %v927, 128
          %vm929 = vcmp.lt.s32.totalorder %v927, 196
          %vm930 = vcmp.lt.s32.totalorder %v928, 196
          %v931 = vsub.f32 %v890, %v920
          %v932 = vsub.f32 %v891, %v920
          %v933 = vsub.f32 %v892, %v921
          %v934 = vsub.f32 %v893, %v921
          %v935 = vsub.f32 %v894, %v922
          %v936 = vsub.f32 %v895, %v922
          %v937 = vsub.f32 %v896, %v923
          %v938 = vsub.f32 %v897, %v923
          %v939 = vsub.f32 %v898, %v924
          %v940 = vsub.f32 %v899, %v924
          %v941 = vsub.f32 %v900, %v925
          %v942 = vsub.f32 %v901, %v925
          %v943 = vsel %vm929, %v931, 0.0
          %v944 = vsel %vm930, %v932, 0.0
          %v945 = vsel %vm929, %v933, 0.0
          %v946 = vsel %vm930, %v934, 0.0
          %v947 = vsel %vm929, %v935, 0.0
          %v948 = vsel %vm930, %v936, 0.0
          %v949 = vsel %vm929, %v937, 0.0
          %v950 = vsel %vm930, %v938, 0.0
          %v951 = vsel %vm929, %v939, 0.0
          %v952 = vsel %vm930, %v940, 0.0
          %v953 = vsel %vm929, %v941, 0.0
          %v954 = vsel %vm930, %v942, 0.0
          %v955 = vmul.f32 %v943, %v943
          %v956 = vmul.f32 %v944, %v944
          %v957 = vmul.f32 %v945, %v945
          %v958 = vmul.f32 %v946, %v946
          %v959 = vmul.f32 %v947, %v947
          %v960 = vmul.f32 %v948, %v948
          %v961 = vmul.f32 %v949, %v949
          %v962 = vmul.f32 %v950, %v950
          %v963 = vmul.f32 %v951, %v951
          %v964 = vmul.f32 %v952, %v952
          %v965 = vmul.f32 %v953, %v953
          %v966 = vmul.f32 %v954, %v954
          %v967 = vadd.f32 %v955, %v956
          %968 = vadd.xlane.f32.xlu0 %v967
          %v969 = vpop.xlane.xlu0 %968
          %v970 = vadd.f32 %v957, %v958
          %971 = vadd.xlane.f32.xlu0 %v970
          %v972 = vpop.xlane.xlu0 %971
          %v973 = vadd.f32 %v959, %v960
          %974 = vadd.xlane.f32.xlu0 %v973
          %v975 = vpop.xlane.xlu0 %974
          %v976 = vadd.f32 %v961, %v962
          %977 = vadd.xlane.f32.xlu0 %v976
          %v978 = vpop.xlane.xlu0 %977
          %v979 = vadd.f32 %v963, %v964
          %980 = vadd.xlane.f32.xlu0 %v979
          %v981 = vpop.xlane.xlu0 %980
          %v982 = vadd.f32 %v965, %v966
          %983 = vadd.xlane.f32.xlu0 %v982
          %v984 = vpop.xlane.xlu0 %983
          %v985 = vmul.f32 %v969, 0.0051020407
          %v986 = vmul.f32 %v972, 0.0051020407
          %v987 = vmul.f32 %v975, 0.0051020407
          %v988 = vmul.f32 %v978, 0.0051020407
          %v989 = vmul.f32 %v981, 0.0051020407
          %v990 = vmul.f32 %v984, 0.0051020407
          %v991 = vadd.f32 %v985, 1e-05
          %v992 = vadd.f32 %v986, 1e-05
          %v993 = vadd.f32 %v987, 1e-05
          %v994 = vadd.f32 %v988, 1e-05
          %v995 = vadd.f32 %v989, 1e-05
          %v996 = vadd.f32 %v990, 1e-05
          %v997 = vrsqrt.pop %v991
          %v998 = vrsqrt.pop %v992
          %v999 = vrsqrt.pop %v993
          %v1000 = vrsqrt.pop %v994
          %v1001 = vrsqrt.pop %v995
          %v1002 = vrsqrt.pop %v996
          %v1003 = vmul.f32 %v931, %v997
          %v1004 = vmul.f32 %v932, %v997
          %v1005 = vmul.f32 %v933, %v998
          %v1006 = vmul.f32 %v934, %v998
          %v1007 = vmul.f32 %v935, %v999
          %v1008 = vmul.f32 %v936, %v999
          %v1009 = vmul.f32 %v937, %v1000
          %v1010 = vmul.f32 %v938, %v1000
          %v1011 = vmul.f32 %v939, %v1001
          %v1012 = vmul.f32 %v940, %v1001
          %v1013 = vmul.f32 %v941, %v1002
          %v1014 = vmul.f32 %v942, %v1002
          %v1015 = vld [vmem:[%s339] sm:$0xff]
          %v1016 = vld [vmem:[%s339 + $0x8] sm:$0xff]
          %v1017 = vld [vmem:[%s339 + $0x10] sm:$0xff]
          %v1018 = vld [vmem:[%s339 + $0x18] sm:$0xff]
          %v1019 = vld [vmem:[%s339 + $0x20] sm:$0xff]
          %v1020 = vld [vmem:[%s339 + $0x28] sm:$0xff]
          %1022 = vset.pattern.permute.xlu0 0
          %1023 = vperm.xlu0 %1022, %v1015
          %v1024 = vpop.permute.xlu0 %1023
          %1027 = vset.pattern.permute.xlu0 0
          %1028 = vperm.xlu0 %1027, %v1016
          %v1029 = vpop.permute.xlu0 %1028
          %1032 = vset.pattern.permute.xlu0 0
          %1033 = vperm.xlu0 %1032, %v1017
          %v1034 = vpop.permute.xlu0 %1033
          %1037 = vset.pattern.permute.xlu0 0
          %1038 = vperm.xlu0 %1037, %v1018
          %v1039 = vpop.permute.xlu0 %1038
          %1042 = vset.pattern.permute.xlu0 0
          %1043 = vperm.xlu0 %1042, %v1019
          %v1044 = vpop.permute.xlu0 %1043
          %1047 = vset.pattern.permute.xlu0 0
          %1048 = vperm.xlu0 %1047, %v1020
          %v1049 = vpop.permute.xlu0 %1048
          %v1051 = vmul.f32 %v1024, %v1003
          %v1052 = vmul.f32 %v1024, %v1004
          %v1053 = vmul.f32 %v1029, %v1005
          %v1054 = vmul.f32 %v1029, %v1006
          %v1055 = vmul.f32 %v1034, %v1007
          %v1056 = vmul.f32 %v1034, %v1008
          %v1057 = vmul.f32 %v1039, %v1009
          %v1058 = vmul.f32 %v1039, %v1010
          %v1059 = vmul.f32 %v1044, %v1011
          %v1060 = vmul.f32 %v1044, %v1012
          %v1061 = vmul.f32 %v1049, %v1013
          %v1062 = vmul.f32 %v1049, %v1014
          %v1063 = vld [vmem:[%s345] sm:$0xff]
          %v1064 = vld [vmem:[%s345 + $0x8] sm:$0xff]
          %v1065 = vld [vmem:[%s345 + $0x10] sm:$0xff]
          %v1066 = vld [vmem:[%s345 + $0x18] sm:$0xff]
          %v1067 = vld [vmem:[%s345 + $0x20] sm:$0xff]
          %v1068 = vld [vmem:[%s345 + $0x28] sm:$0xff]
          %1070 = vset.pattern.permute.xlu0 0
          %1071 = vperm.xlu0 %1070, %v1063
          %v1072 = vpop.permute.xlu0 %1071
          %1075 = vset.pattern.permute.xlu0 0
          %1076 = vperm.xlu0 %1075, %v1064
          %v1077 = vpop.permute.xlu0 %1076
          %1080 = vset.pattern.permute.xlu0 0
          %1081 = vperm.xlu0 %1080, %v1065
          %v1082 = vpop.permute.xlu0 %1081
          %1085 = vset.pattern.permute.xlu0 0
          %1086 = vperm.xlu0 %1085, %v1066
          %v1087 = vpop.permute.xlu0 %1086
          %1090 = vset.pattern.permute.xlu0 0
          %1091 = vperm.xlu0 %1090, %v1067
          %v1092 = vpop.permute.xlu0 %1091
          %1095 = vset.pattern.permute.xlu0 0
          %1096 = vperm.xlu0 %1095, %v1068
          %v1097 = vpop.permute.xlu0 %1096
          %v1099 = vadd.f32 %v1051, %v1072
          %v1100 = vadd.f32 %v1052, %v1072
          %v1101 = vadd.f32 %v1053, %v1077
          %v1102 = vadd.f32 %v1054, %v1077
          %v1103 = vadd.f32 %v1055, %v1082
          %v1104 = vadd.f32 %v1056, %v1082
          %v1105 = vadd.f32 %v1057, %v1087
          %v1106 = vadd.f32 %v1058, %v1087
          %v1107 = vadd.f32 %v1059, %v1092
          %v1108 = vadd.f32 %v1060, %v1092
          %v1109 = vadd.f32 %v1061, %v1097
          %v1110 = vadd.f32 %v1062, %v1097
          %1111 = vst [vmem:[%s309] sm:$0xff] %v1099
          %1112 = vst [vmem:[%s309 + $0x8] sm:$0xff] %v1100
          %1113 = vst [vmem:[%s309 + $0x10] sm:$0xff] %v1101
          %1114 = vst [vmem:[%s309 + $0x18] sm:$0xff] %v1102
          %1115 = vst [vmem:[%s309 + $0x20] sm:$0xff] %v1103
          %1116 = vst [vmem:[%s309 + $0x28] sm:$0xff] %v1104
          %1117 = vst [vmem:[%s309 + $0x30] sm:$0xff] %v1105
          %1118 = vst [vmem:[%s309 + $0x38] sm:$0xff] %v1106
          %1119 = vst [vmem:[%s309 + $0x40] sm:$0xff] %v1107
          %1120 = vst [vmem:[%s309 + $0x48] sm:$0xff] %v1108
          %1121 = vst [vmem:[%s309 + $0x50] sm:$0xff] %v1109
          %1122 = vst [vmem:[%s309 + $0x58] sm:$0xff] %v1110
        $region52: #{tpu_custom_call.1} parent=39 // pred_fallthru
          _
        %s1123 = sand.u32 %s171, 1
        %s1124 = scalar_lea.sflag [#allocation3], %s1123
        %s1125 = sand.u32 %s171, 1
        %s1126 = smul.addr %s1125, 96
        %s1127 = scalar_lea.vmem [#allocation2], %s1126
        // Predicated region
        $region53: #{tpu_custom_call.1} parent=39 // pred_check
          %p1128 = pneg %p181
        $region54: #{tpu_custom_call.1} parent=39 // pred_check_branch
          %1130 = sbr.rel (%p1128) target = $region56
        $region55: #{tpu_custom_call.1} parent=39 // pred_region
          %s1131 = smul.u32 6, %s23
          %s1133 = ssub.s32 1536, 1536
          %1134 = vsyncadd %s1124, %s1133
          %s1135 = smul.addr %s1131, 2
          %s1136 = smul.addr %s1135, 128
          %s1137 = scalar_lea.hbm %s5, %s1136
          %s1138 = sshll.u32 %s1127, 4
          %s1139 = int_to_ptr.vmem [resolvable:$true] %s1138
          %1144 = dma.vmem_to_hbm [thread:$0]  %s1139, 1536, %s1137, %s1124, 256, 256, 16
        $region56: #{tpu_custom_call.1} parent=39 // pred_fallthru
          _
      $region40: #{tpu_custom_call.1} parent=5 // pred_fallthru
        _
      %p1145 = scmp.le.s32.totalorder 2, %s14
      // Predicated region
      $region57: #{tpu_custom_call.1} parent=5 // pred_check
        %p1146 = pneg %p1145
      $region58: #{tpu_custom_call.1} parent=5 // pred_check_branch
        %1148 = sbr.rel (%p1146) target = $region60
      $region59: #{tpu_custom_call.1} parent=5 // pred_region
        %s1149 = ssub.s32 %s14, 2
        // Predicated region
        $region61: #{tpu_custom_call.1} parent=59 // pred_check
          %p1150 = pneg %p187
        $region62: #{tpu_custom_call.1} parent=59 // pred_check_branch
          %1152 = sbr.rel (%p1150) target = $region64
        $region63: #{tpu_custom_call.1} parent=59 // pred_region
          %s1153 = sand.u32 %s172, 1
          %s1154 = scalar_lea.sflag [#allocation3], %s1153
          %s1155 = sand.u32 %s172, 1
          %s1156 = smul.addr %s1155, 96
          %s1157 = scalar_lea.vmem [#allocation2], %s1156
          %1158 = dma.done %s1154, 1536
        $region64: #{tpu_custom_call.1} parent=59 // pred_fallthru
          _
      $region60: #{tpu_custom_call.1} parent=5 // pred_fallthru
        _
    $region6: #{tpu_custom_call.1} parent=1 // loop_footer
      %s18 = sadd.s32 1, %s14
    $region7: #{tpu_custom_call.1} parent=1 // loop_footer_branch
      %13 = sbr.rel target = $region3
    $region8: #{tpu_custom_call.1} parent=1 // loop_exit
      _
    %1159 = vsyncpa [#allocation3], 1
    %s1160 = scalar_lea.sflag [#allocation3], 1
    %1161 = vsyncpa %s1160, 1

</llo_original>
